<compile_context>
chip_gen: v6e
topology: v6e:2x2x1
jax: 0.10.0
libtpu: 0.0.40
codegen_flags: <defaults>
</compile_context>

<pallas_src>
import functools
import math

import jax
import jax.numpy as jnp
from jax.experimental import pallas as pl
from jax.experimental.pallas import tpu as pltpu

_VAR_FLOOR = 1e-6  # GPyTorch effectively floors the predictive variance


# ----------------------------- Pallas kernel ---------------------------------
def _online_gp_forward_kernel(outscale, x_ref, w1t_ref, b1_ref, w2st_ref,
                              b2_ref, zs_ref, z2_ref, wmat_ref, mvec_ref,
                              out_ref):
    # ---- stem MLP, lane-major, inv lengthscale folded into layer 2 ----
    #   fs = W2s^T relu(W1^T x + b1) + b2s                    shapes: (D, tN)
    xt = x_ref[...]                                                    # (in, tN)
    h = jnp.dot(w1t_ref[...], xt, preferred_element_type=jnp.float32)  # (H, tN)
    h = jnp.maximum(h + b1_ref[...], 0.0)
    fs = jnp.dot(w2st_ref[...], h, preferred_element_type=jnp.float32)
    fs = fs + b2_ref[...]                                              # (D, tN)

    # ---- ARD-RBF cross covariance (outputscale folded into wmat_s / mvec_row)
    cross = jnp.dot(zs_ref[...], fs, preferred_element_type=jnp.float32)  # (M, tN)
    f2 = jnp.sum(fs * fs, axis=0, keepdims=True)                       # (1, tN)
    d2 = jnp.maximum(z2_ref[...] + f2 - 2.0 * cross, 0.0)              # (M, tN)
    k = jnp.exp(-0.5 * d2)                                             # (M, tN)

    # ---- GP predictive: two small MXU dots, lane-dense (1, tN) results ----
    wk = jnp.dot(wmat_ref[...], k, preferred_element_type=jnp.float32)    # (M, tN)
    mean = jnp.dot(mvec_ref[...], k, preferred_element_type=jnp.float32)  # (1, tN)
    var = outscale + jnp.sum(wk * k, axis=0, keepdims=True)               # (1, tN)
    var = jnp.maximum(var, _VAR_FLOOR)

    out_ref[0:1, :] = mean
    out_ref[1:2, :] = var


# --------------------------------- wrapper ------------------------------------
def _choose_block_n(n, requested=1024):
    """Batch tile: multiple of 128 (lane-dense output), capped at 2048, and at
    half the padded batch so v7x's two TensorCores both get at least one tile."""
    n128 = int(128 * pl.cdiv(n, 128))
    if n128 >= 256:
        cap = max(128, ((n128 // 2) // 128) * 128)
    else:
        cap = n128
    bn = min(int(requested), cap, 2048)
    return max(128, (bn // 128) * 128)


def online_pac_gp_forward(x, params, block_n=1024):
    """x: (..., input_dim); returns (mean (N,), var (N,)) with N = prod(leading dims)."""
    input_dim = params["w1"].shape[0]
    x = x.reshape(-1, input_dim).astype(jnp.float32)   # inputs.view(-1, input_dim)
    n = x.shape[0]
    bn = _choose_block_n(n, block_n)
    n_pad = int(bn * pl.cdiv(n, bn))
    if n_pad != n:
        x = jnp.pad(x, ((0, n_pad - n), (0, 0)))
    xt = x.T                              # (input_dim, n_pad): batch on the lane axis

    args = (xt, params["w1t"], params["b1c"], params["w2st"], params["b2sc"],
            params["zs"], params["z2c"], params["wmat_s"], params["mvec_row"])

    in_specs = [pl.BlockSpec((input_dim, bn), lambda i: (0, i))]
    in_specs += [pl.BlockSpec(a.shape, lambda i: (0, 0)) for a in args[1:]]

    kernel = functools.partial(_online_gp_forward_kernel, float(params["outscale"]))

    out = pl.pallas_call(
        kernel,
        out_shape=jax.ShapeDtypeStruct((2, n_pad), jnp.float32),
        grid=(n_pad // bn,),
        in_specs=in_specs,
        out_specs=pl.BlockSpec((2, bn), lambda i: (0, i)),
        compiler_params=pltpu.CompilerParams(
            dimension_semantics=("parallel",)),
    )(*args)
    return out[0, :n], out[1, :n]


# ------------------------- deterministic parameter setup ----------------------
def init_params(key, input_dim, hidden_dim, output_dim, num_inducing, jitter=1e-4):
    ks = jax.random.split(key, 6)
    w1 = (jax.random.normal(ks[0], (input_dim, hidden_dim), jnp.float32)
          / math.sqrt(input_dim))
    b1 = jnp.zeros((1, hidden_dim), jnp.float32)
    w2 = (jax.random.normal(ks[1], (hidden_dim, output_dim), jnp.float32)
          / math.sqrt(hidden_dim))
    b2 = jnp.zeros((1, output_dim), jnp.float32)

    # inducing_points ~ U(-1, 1)   (num_inducing, stem.output_dim)
    z = jax.random.uniform(ks[2], (num_inducing, output_dim), jnp.float32, -1.0, 1.0)

    lengthscale = jnp.exp(0.1 * jax.random.normal(ks[3], (output_dim,), jnp.float32))
    outputscale = 1.0  # Python float -> closure constant in the kernel

    # variational distribution q(u) = N(m, S = L_S L_S^T) (perturbed, non-trivial)
    m = 0.1 * jax.random.normal(ks[4], (num_inducing,), jnp.float32)
    l_s = (0.7 * jnp.eye(num_inducing, dtype=jnp.float32)
           + 0.05 * jnp.tril(jax.random.normal(ks[5], (num_inducing, num_inducing),
                                               jnp.float32)))
    s_mat = l_s @ l_s.T

    inv_ls = (1.0 / lengthscale).astype(jnp.float32)
    zs = z * inv_ls[None, :]
    zz = jnp.sum(zs * zs, axis=-1)
    d2 = jnp.maximum(zz[:, None] + zz[None, :] - 2.0 * zs @ zs.T, 0.0)
    kzz = (outputscale * jnp.exp(-0.5 * d2)
           + jitter * jnp.eye(num_inducing, dtype=jnp.float32))
    lzz = jnp.linalg.cholesky(kzz)

    # mean_vec = Lzz^{-T} m ;  W = Lzz^{-T} (S - I) Lzz^{-1}
    mvec = jax.scipy.linalg.solve_triangular(lzz.T, m, lower=False)
    a = s_mat - jnp.eye(num_inducing, dtype=jnp.float32)
    x1 = jax.scipy.linalg.solve_triangular(lzz.T, a, lower=False)          # Lzz^{-T} A
    wmat = jax.scipy.linalg.solve_triangular(lzz.T, x1.T, lower=False).T   # X Lzz^{-1}

    # ----- kernel-side folded + transposed (lane-major) parameters -----
    w1t = w1.T.astype(jnp.float32)                       # (H, in)
    b1c = b1.T.astype(jnp.float32)                       # (H, 1)
    w2st = (w2 * inv_ls[None, :]).T.astype(jnp.float32)  # (D, H), lengthscale folded
    b2sc = (b2 * inv_ls[None, :]).T.astype(jnp.float32)  # (D, 1)
    z2c = zz[:, None].astype(jnp.float32)                # (M, 1)
    wmat_s = ((outputscale * outputscale) * wmat).astype(jnp.float32)   # (M, M)
    mvec_row = (outputscale * mvec)[None, :].astype(jnp.float32)        # (1, M)

    return dict(
        # raw params (used by the pure-JAX reference, checks the folding too)
        w1=w1, b1=b1, w2=w2, b2=b2, z=z, inv_ls=inv_ls[None, :],
        mvec=mvec[:, None].astype(jnp.float32), wmat=wmat.astype(jnp.float32),
        # folded params consumed by the Pallas kernel
        w1t=w1t, b1c=b1c, w2st=w2st, b2sc=b2sc,
        zs=zs.astype(jnp.float32),                       # (M, D)
        z2c=z2c, wmat_s=wmat_s, mvec_row=mvec_row,
        outscale=float(outputscale),
    )


# ------------------------------ pure-JAX reference ----------------------------
def reference_forward(x, p):
    """Un-folded math, straight from the SVGP predictive equations."""
    input_dim = p["w1"].shape[0]
    x = x.reshape(-1, input_dim).astype(jnp.float32)
    h = jnp.maximum(x @ p["w1"] + p["b1"], 0.0)
    f = h @ p["w2"] + p["b2"]
    fs = f * p["inv_ls"]
    zs = p["z"] * p["inv_ls"]
    d2 = jnp.maximum(jnp.sum(fs * fs, -1, keepdims=True)
                     + jnp.sum(zs * zs, -1)[None, :]
                     - 2.0 * fs @ zs.T, 0.0)
    s = p["outscale"]
    kxz = s * jnp.exp(-0.5 * d2)
    mean = (kxz @ p["mvec"])[:, 0]
    var = s + jnp.sum((kxz @ p["wmat"]) * kxz, -1)
    var = jnp.maximum(var, _VAR_FLOOR)
    return mean, var


# ------------------------------------ main ------------------------------------
if __name__ == "__main__":
    INPUT_DIM, HIDDEN, OUTPUT_DIM, NUM_INDUCING = 8, 32, 16, 32

    key = jax.random.PRNGKey(0)
    k_x, k_p = jax.random.split(key)
    # inputs of shape (2, 8, 8) -> forward views them as (-1, input_dim) = (16, 8)
    x = jax.random.normal(k_x, (2, 8, INPUT_DIM), jnp.float32)
    params = init_params(k_p, INPUT_DIM, HIDDEN, OUTPUT_DIM, NUM_INDUCING)

    mean, var = online_pac_gp_forward(x, params)
    jax.block_until_ready((mean, var))

    mean_ref, var_ref = reference_forward(x, params)
    assert mean.shape == (16,) and var.shape == (16,)
    assert jnp.allclose(mean, mean_ref, atol=1e-4, rtol=1e-4)
    assert jnp.allclose(var, var_ref, atol=1e-4, rtol=1e-4)
    assert bool(jnp.all(var > 0.0))

    # TODO(synk): fit/update/get_fantasy_model (training-time streaming updates) and
    # likelihood-noise addition in predict() are out of scope for the forward kernel.
    print("KERNEL_OK")
</pallas_src>

<mosaic_0001>
module attributes {stable_mosaic.version = 11 : i64} {
  func.func @_online_gp_forward_kernel(%arg0: i32, %arg1: memref<8x128xf32, #tpu.memory_space<vmem>>, %arg2: memref<32x8xf32, #tpu.memory_space<vmem>>, %arg3: memref<32x1xf32, #tpu.memory_space<vmem>>, %arg4: memref<16x32xf32, #tpu.memory_space<vmem>>, %arg5: memref<16x1xf32, #tpu.memory_space<vmem>>, %arg6: memref<32x16xf32, #tpu.memory_space<vmem>>, %arg7: memref<32x1xf32, #tpu.memory_space<vmem>>, %arg8: memref<32x32xf32, #tpu.memory_space<vmem>>, %arg9: memref<1x32xf32, #tpu.memory_space<vmem>>, %arg10: memref<2x128xf32, #tpu.memory_space<vmem>>) attributes {dimension_semantics = [#tpu.dimension_semantics<parallel>], iteration_bounds = array<i64: 1>, scalar_prefetch = 0 : i64, scratch_operands = 0 : i64, tpu.core_type = #tpu.core_type<tc>, window_params = [{transform_indices = @transform_0, window_bounds = array<i64: 8, 128>}, {pipeline_mode = #tpu.pipeline_mode<synchronous>, transform_indices = @transform_1, window_bounds = array<i64: 32, 8>}, {pipeline_mode = #tpu.pipeline_mode<synchronous>, transform_indices = @transform_2, window_bounds = array<i64: 32, 1>}, {pipeline_mode = #tpu.pipeline_mode<synchronous>, transform_indices = @transform_3, window_bounds = array<i64: 16, 32>}, {pipeline_mode = #tpu.pipeline_mode<synchronous>, transform_indices = @transform_4, window_bounds = array<i64: 16, 1>}, {pipeline_mode = #tpu.pipeline_mode<synchronous>, transform_indices = @transform_5, window_bounds = array<i64: 32, 16>}, {pipeline_mode = #tpu.pipeline_mode<synchronous>, transform_indices = @transform_6, window_bounds = array<i64: 32, 1>}, {pipeline_mode = #tpu.pipeline_mode<synchronous>, transform_indices = @transform_7, window_bounds = array<i64: 32, 32>}, {pipeline_mode = #tpu.pipeline_mode<synchronous>, transform_indices = @transform_8, window_bounds = array<i64: 1, 32>}, {transform_indices = @transform_9, window_bounds = array<i64: 2, 128>}]} {
    %c0 = arith.constant 0 : index
    %c0_0 = arith.constant 0 : index
    %0 = vector.load %arg1[%c0, %c0_0] : memref<8x128xf32, #tpu.memory_space<vmem>>, vector<8x128xf32>
    %c0_1 = arith.constant 0 : index
    %c0_2 = arith.constant 0 : index
    %1 = vector.load %arg2[%c0_1, %c0_2] : memref<32x8xf32, #tpu.memory_space<vmem>>, vector<32x8xf32>
    %cst = arith.constant dense<0.000000e+00> : vector<32x128xf32>
    %2 = tpu.matmul %1, %0, %cst {dimension_numbers = #tpu.dot_dimension_numbers<[1], [0], [0], [1], [0, 0, 1, 1], [], []>} : vector<32x8xf32>, vector<8x128xf32>, vector<32x128xf32> -> vector<32x128xf32>
    %c0_3 = arith.constant 0 : index
    %c0_4 = arith.constant 0 : index
    %3 = vector.load %arg3[%c0_3, %c0_4] : memref<32x1xf32, #tpu.memory_space<vmem>>, vector<32x1xf32>
    %4 = vector.broadcast %3 : vector<32x1xf32> to vector<32x128xf32>
    %5 = arith.addf %2, %4 : vector<32x128xf32>
    %cst_5 = arith.constant 0.000000e+00 : f32
    %6 = vector.broadcast %cst_5 : f32 to vector<32x128xf32>
    %7 = arith.maximumf %5, %6 : vector<32x128xf32>
    %c0_6 = arith.constant 0 : index
    %c0_7 = arith.constant 0 : index
    %8 = vector.load %arg4[%c0_6, %c0_7] : memref<16x32xf32, #tpu.memory_space<vmem>>, vector<16x32xf32>
    %cst_8 = arith.constant dense<0.000000e+00> : vector<16x128xf32>
    %9 = tpu.matmul %8, %7, %cst_8 {dimension_numbers = #tpu.dot_dimension_numbers<[1], [0], [0], [1], [0, 0, 1, 1], [], []>} : vector<16x32xf32>, vector<32x128xf32>, vector<16x128xf32> -> vector<16x128xf32>
    %c0_9 = arith.constant 0 : index
    %c0_10 = arith.constant 0 : index
    %10 = vector.load %arg5[%c0_9, %c0_10] : memref<16x1xf32, #tpu.memory_space<vmem>>, vector<16x1xf32>
    %11 = vector.broadcast %10 : vector<16x1xf32> to vector<16x128xf32>
    %12 = arith.addf %9, %11 : vector<16x128xf32>
    %c0_11 = arith.constant 0 : index
    %c0_12 = arith.constant 0 : index
    %13 = vector.load %arg6[%c0_11, %c0_12] : memref<32x16xf32, #tpu.memory_space<vmem>>, vector<32x16xf32>
    %cst_13 = arith.constant dense<0.000000e+00> : vector<32x128xf32>
    %14 = tpu.matmul %13, %12, %cst_13 {dimension_numbers = #tpu.dot_dimension_numbers<[1], [0], [0], [1], [0, 0, 1, 1], [], []>} : vector<32x16xf32>, vector<16x128xf32>, vector<32x128xf32> -> vector<32x128xf32>
    %15 = arith.mulf %12, %12 : vector<16x128xf32>
    %cst_14 = arith.constant dense<0.000000e+00> : vector<128xf32>
    %16 = vector.multi_reduction <add>, %15, %cst_14 [0] : vector<16x128xf32> to vector<128xf32>
    %17 = vector.shape_cast %16 : vector<128xf32> to vector<1x128xf32>
    %c0_15 = arith.constant 0 : index
    %c0_16 = arith.constant 0 : index
    %18 = vector.load %arg7[%c0_15, %c0_16] : memref<32x1xf32, #tpu.memory_space<vmem>>, vector<32x1xf32>
    %19 = vector.broadcast %18 : vector<32x1xf32> to vector<32x128xf32>
    %20 = vector.broadcast %17 : vector<1x128xf32> to vector<32x128xf32>
    %21 = arith.addf %19, %20 : vector<32x128xf32>
    %cst_17 = arith.constant 2.000000e+00 : f32
    %22 = vector.broadcast %cst_17 : f32 to vector<32x128xf32>
    %23 = arith.mulf %22, %14 : vector<32x128xf32>
    %24 = arith.subf %21, %23 : vector<32x128xf32>
    %cst_18 = arith.constant 0.000000e+00 : f32
    %25 = vector.broadcast %cst_18 : f32 to vector<32x128xf32>
    %26 = arith.maximumf %24, %25 : vector<32x128xf32>
    %cst_19 = arith.constant -5.000000e-01 : f32
    %27 = vector.broadcast %cst_19 : f32 to vector<32x128xf32>
    %28 = arith.mulf %27, %26 : vector<32x128xf32>
    %29 = math.exp %28 : vector<32x128xf32>
    %c0_20 = arith.constant 0 : index
    %c0_21 = arith.constant 0 : index
    %30 = vector.load %arg8[%c0_20, %c0_21] : memref<32x32xf32, #tpu.memory_space<vmem>>, vector<32x32xf32>
    %cst_22 = arith.constant dense<0.000000e+00> : vector<32x128xf32>
    %31 = tpu.matmul %30, %29, %cst_22 {dimension_numbers = #tpu.dot_dimension_numbers<[1], [0], [0], [1], [0, 0, 1, 1], [], []>} : vector<32x32xf32>, vector<32x128xf32>, vector<32x128xf32> -> vector<32x128xf32>
    %c0_23 = arith.constant 0 : index
    %c0_24 = arith.constant 0 : index
    %32 = vector.load %arg9[%c0_23, %c0_24] : memref<1x32xf32, #tpu.memory_space<vmem>>, vector<1x32xf32>
    %cst_25 = arith.constant dense<0.000000e+00> : vector<1x128xf32>
    %33 = tpu.matmul %32, %29, %cst_25 {dimension_numbers = #tpu.dot_dimension_numbers<[1], [0], [0], [1], [0, 0, 1, 1], [], []>} : vector<1x32xf32>, vector<32x128xf32>, vector<1x128xf32> -> vector<1x128xf32>
    %34 = arith.mulf %31, %29 : vector<32x128xf32>
    %cst_26 = arith.constant dense<0.000000e+00> : vector<128xf32>
    %35 = vector.multi_reduction <add>, %34, %cst_26 [0] : vector<32x128xf32> to vector<128xf32>
    %36 = vector.shape_cast %35 : vector<128xf32> to vector<1x128xf32>
    %cst_27 = arith.constant 1.000000e+00 : f32
    %37 = vector.broadcast %cst_27 : f32 to vector<1x128xf32>
    %38 = arith.addf %37, %36 : vector<1x128xf32>
    %cst_28 = arith.constant 9.99999997E-7 : f32
    %39 = vector.broadcast %cst_28 : f32 to vector<1x128xf32>
    %40 = arith.maximumf %38, %39 : vector<1x128xf32>
    %c0_29 = arith.constant 0 : index
    %c0_30 = arith.constant 0 : index
    %41 = vector.load %arg10[%c0_29, %c0_30] : memref<2x128xf32, #tpu.memory_space<vmem>>, vector<1x128xf32>
    tpu.vector_store %arg10[%c0_29, %c0_30], %33 {strides = array<i32>} : memref<2x128xf32, #tpu.memory_space<vmem>>, vector<1x128xf32>,
    %c1 = arith.constant 1 : index
    %c0_31 = arith.constant 0 : index
    %42 = vector.load %arg10[%c1, %c0_31] : memref<2x128xf32, #tpu.memory_space<vmem>>, vector<1x128xf32>
    tpu.vector_store %arg10[%c1, %c0_31], %40 {strides = array<i32>} : memref<2x128xf32, #tpu.memory_space<vmem>>, vector<1x128xf32>,
    return
  }
  func.func @transform_0(%arg0: i32) -> (i32, i32) {
    %c0_i32 = arith.constant 0 : i32
    %c0_i32_0 = arith.constant 0 : i32
    return %c0_i32, %arg0 : i32, i32
  }
  func.func @transform_1(%arg0: i32) -> (i32, i32) {
    %c0_i32 = arith.constant 0 : i32
    %c0_i32_0 = arith.constant 0 : i32
    %c0_i32_1 = arith.constant 0 : i32
    return %c0_i32, %c0_i32_0 : i32, i32
  }
  func.func @transform_2(%arg0: i32) -> (i32, i32) {
    %c0_i32 = arith.constant 0 : i32
    %c0_i32_0 = arith.constant 0 : i32
    %c0_i32_1 = arith.constant 0 : i32
    return %c0_i32, %c0_i32_0 : i32, i32
  }
  func.func @transform_3(%arg0: i32) -> (i32, i32) {
    %c0_i32 = arith.constant 0 : i32
    %c0_i32_0 = arith.constant 0 : i32
    %c0_i32_1 = arith.constant 0 : i32
    return %c0_i32, %c0_i32_0 : i32, i32
  }
  func.func @transform_4(%arg0: i32) -> (i32, i32) {
    %c0_i32 = arith.constant 0 : i32
    %c0_i32_0 = arith.constant 0 : i32
    %c0_i32_1 = arith.constant 0 : i32
    return %c0_i32, %c0_i32_0 : i32, i32
  }
  func.func @transform_5(%arg0: i32) -> (i32, i32) {
    %c0_i32 = arith.constant 0 : i32
    %c0_i32_0 = arith.constant 0 : i32
    %c0_i32_1 = arith.constant 0 : i32
    return %c0_i32, %c0_i32_0 : i32, i32
  }
  func.func @transform_6(%arg0: i32) -> (i32, i32) {
    %c0_i32 = arith.constant 0 : i32
    %c0_i32_0 = arith.constant 0 : i32
    %c0_i32_1 = arith.constant 0 : i32
    return %c0_i32, %c0_i32_0 : i32, i32
  }
  func.func @transform_7(%arg0: i32) -> (i32, i32) {
    %c0_i32 = arith.constant 0 : i32
    %c0_i32_0 = arith.constant 0 : i32
    %c0_i32_1 = arith.constant 0 : i32
    return %c0_i32, %c0_i32_0 : i32, i32
  }
  func.func @transform_8(%arg0: i32) -> (i32, i32) {
    %c0_i32 = arith.constant 0 : i32
    %c0_i32_0 = arith.constant 0 : i32
    %c0_i32_1 = arith.constant 0 : i32
    return %c0_i32, %c0_i32_0 : i32, i32
  }
  func.func @transform_9(%arg0: i32) -> (i32, i32) {
    %c0_i32 = arith.constant 0 : i32
    %c0_i32_0 = arith.constant 0 : i32
    return %c0_i32, %arg0 : i32, i32
  }
}

</mosaic_0001>

<llo_original>
// kernel: tpu_custom_call.1
$region0: #{tpu_custom_call.1}
  #allocation0 [shape = 'u32[]', space=smem, size = 0x4, offset = 0x4, fixed_abs, tag = 'smem constant byte address 0x4 - core index']
  #allocation1 [shape = 'u32[144,128]{1,0:T(1,128)}', space=vmem, size = 0x12000, scoped, tag = 'internal scratch']
  %s0 = inlined_call_operand.vmem [shape: f32[8,128], index: 0, kind: input, shape index: {}]
  %s1 = inlined_call_operand.vmem [shape: f32[32,8], index: 1, kind: input, shape index: {}]
  %s2 = inlined_call_operand.vmem [shape: f32[32,1], index: 2, kind: input, shape index: {}]
  %s3 = inlined_call_operand.vmem [shape: f32[16,32], index: 3, kind: input, shape index: {}]
  %s4 = inlined_call_operand.vmem [shape: f32[16,1], index: 4, kind: input, shape index: {}]
  %s5 = inlined_call_operand.vmem [shape: f32[32,16], index: 5, kind: input, shape index: {}]
  %s6 = inlined_call_operand.vmem [shape: f32[32,1], index: 6, kind: input, shape index: {}]
  %s7 = inlined_call_operand.vmem [shape: f32[32,32], index: 7, kind: input, shape index: {}]
  %s8 = inlined_call_operand.vmem [shape: f32[1,32], index: 8, kind: input, shape index: {}]
  %s9 = inlined_call_operand.hbm [shape: f32[2,128], index: 9, kind: output, shape index: {}]
  %s10 = sld [smem:[#allocation0]]
  $region46: #{tpu_custom_call.1} parent=0
    _
  %s12 = ssub.s32 1, %s10
  %s13 = scalar_select 0, %s12, %s10
  $region1: #{tpu_custom_call.1} parent=0
    #allocation2 [shape = 'u8[1024]{0}', space=vmem, size = 0x400, scoped, tag = 'output window, operand 0, single buffered']
    #allocation3 [shape = 's32[1]{0}', space=sflag, size = 0x4, scoped, tag = 'scoped memory for tpu_custom_call.1']
    %14 = vsyncpa [#allocation3], 0
    // Predicated region
    $region2: #{tpu_custom_call.1} parent=1 // pred_check
      _
    $region3: #{tpu_custom_call.1} parent=1 // pred_check_branch
      %16 = sbr.rel (0) target = $region5
    $region4: #{tpu_custom_call.1} parent=1 // pred_region
      _
    $region5: #{tpu_custom_call.1} parent=1 // pred_fallthru
      _
    // Predicated region
    $region6: #{tpu_custom_call.1} parent=1 // pred_check
      _
    $region7: #{tpu_custom_call.1} parent=1 // pred_check_branch
      %18 = sbr.rel (0) target = $region9
    $region8: #{tpu_custom_call.1} parent=1 // pred_region
      _
    $region9: #{tpu_custom_call.1} parent=1 // pred_fallthru
      _
    // Predicated region
    $region10: #{tpu_custom_call.1} parent=1 // pred_check
      _
    $region11: #{tpu_custom_call.1} parent=1 // pred_check_branch
      %20 = sbr.rel (0) target = $region13
    $region12: #{tpu_custom_call.1} parent=1 // pred_region
      _
    $region13: #{tpu_custom_call.1} parent=1 // pred_fallthru
      _
    // Predicated region
    $region14: #{tpu_custom_call.1} parent=1 // pred_check
      _
    $region15: #{tpu_custom_call.1} parent=1 // pred_check_branch
      %22 = sbr.rel (0) target = $region17
    $region16: #{tpu_custom_call.1} parent=1 // pred_region
      _
    $region17: #{tpu_custom_call.1} parent=1 // pred_fallthru
      _
    // Predicated region
    $region18: #{tpu_custom_call.1} parent=1 // pred_check
      _
    $region19: #{tpu_custom_call.1} parent=1 // pred_check_branch
      %24 = sbr.rel (0) target = $region21
    $region20: #{tpu_custom_call.1} parent=1 // pred_region
      _
    $region21: #{tpu_custom_call.1} parent=1 // pred_fallthru
      _
    // Predicated region
    $region22: #{tpu_custom_call.1} parent=1 // pred_check
      _
    $region23: #{tpu_custom_call.1} parent=1 // pred_check_branch
      %26 = sbr.rel (0) target = $region25
    $region24: #{tpu_custom_call.1} parent=1 // pred_region
      _
    $region25: #{tpu_custom_call.1} parent=1 // pred_fallthru
      _
    // Predicated region
    $region26: #{tpu_custom_call.1} parent=1 // pred_check
      _
    $region27: #{tpu_custom_call.1} parent=1 // pred_check_branch
      %28 = sbr.rel (0) target = $region29
    $region28: #{tpu_custom_call.1} parent=1 // pred_region
      _
    $region29: #{tpu_custom_call.1} parent=1 // pred_fallthru
      _
    // Predicated region
    $region30: #{tpu_custom_call.1} parent=1 // pred_check
      _
    $region31: #{tpu_custom_call.1} parent=1 // pred_check_branch
      %30 = sbr.rel (0) target = $region33
    $region32: #{tpu_custom_call.1} parent=1 // pred_region
      _
    $region33: #{tpu_custom_call.1} parent=1 // pred_fallthru
      _
    // Predicated region
    $region34: #{tpu_custom_call.1} parent=1 // pred_check
      _
    $region35: #{tpu_custom_call.1} parent=1 // pred_check_branch
      %32 = sbr.rel (0) target = $region37
    $region36: #{tpu_custom_call.1} parent=1 // pred_region
      _
    $region37: #{tpu_custom_call.1} parent=1 // pred_fallthru
      _
    %v33 = vld [vmem:[%s0] sm:$0xff]
    %v34 = vld [vmem:[%s1] sm:$0xff]
    %v35 = vld [vmem:[%s1 + $0x8] sm:$0xff]
    %v36 = vld [vmem:[%s1 + $0x10] sm:$0xff]
    %v37 = vld [vmem:[%s1 + $0x18] sm:$0xff]
    %v38 = vld [vmem:[%s2] sm:$0xff]
    %v39 = vld [vmem:[%s2 + $0x8] sm:$0xff]
    %v40 = vld [vmem:[%s2 + $0x10] sm:$0xff]
    %v41 = vld [vmem:[%s2 + $0x18] sm:$0xff]
    %43 = vset.pattern.permute.xlu0 0
    %44 = vperm.xlu0 %43, %v38
    %v45 = vpop.permute.xlu0 %44
    %48 = vset.pattern.permute.xlu0 0
    %49 = vperm.xlu0 %48, %v39
    %v50 = vpop.permute.xlu0 %49
    %53 = vset.pattern.permute.xlu0 0
    %54 = vperm.xlu0 %53, %v40
    %v55 = vpop.permute.xlu0 %54
    %58 = vset.pattern.permute.xlu0 0
    %59 = vperm.xlu0 %58, %v41
    %v60 = vpop.permute.xlu0 %59
    %vm62 = vcmask 64512
    %v64 = vsel %vm62, %v34, 0
    %v67 = vsel %vm62, %v35, 0
    %v70 = vsel %vm62, %v36, 0
    %v73 = vsel %vm62, %v37, 0
    %75 = vmatprep.subr.mxu0 0.0
    %76 = vmatpush1.msra.mxu0 0.0
    %77 = vmatprep.subr.mxu0 0.0
    %78 = vmatpush1.msra.mxu0 0.0
    %79 = vmatprep.subr.mxu0 0.0
    %80 = vmatpush1.msra.mxu0 0.0
    %81 = vmatprep.subr.mxu0 0.0
    %82 = vmatpush1.msra.mxu0 0.0
    %83 = vmatprep.subr.mxu0 0.0
    %84 = vmatpush1.msra.mxu0 0.0
    %85 = vmatprep.subr.mxu0 0.0
    %86 = vmatpush1.msra.mxu0 0.0
    %87 = vmatprep.subr.mxu0 0.0
    %88 = vmatpush1.msra.mxu0 0.0
    %89 = vmatprep.subr.mxu0 0.0
    %90 = vmatpush1.msra.mxu0 0.0
    %91 = vmatprep.subr.mxu0 0.0
    %92 = vmatpush1.msra.mxu0 0.0
    %93 = vmatprep.subr.mxu0 0.0
    %94 = vmatpush1.msra.mxu0 0.0
    %95 = vmatprep.subr.mxu0 0.0
    %96 = vmatpush1.msra.mxu0 0.0
    %97 = vmatprep.subr.mxu0 0.0
    %98 = vmatpush1.msra.mxu0 0.0
    %99 = vmatprep.subr.mxu0 0.0
    %100 = vmatpush1.msra.mxu0 0.0
    %101 = vmatprep.subr.mxu0 0.0
    %102 = vmatpush1.msra.mxu0 0.0
    %103 = vmatprep.subr.mxu0 0.0
    %104 = vmatpush1.msra.mxu0 0.0
    %105 = vmatprep.subr.mxu0 0.0
    %106 = vmatpush1.msra.mxu0 %v33
    %107 = vmatprep.subr.mxu0 0.0
    %108 = vmatpush2.msra.mxu0 0.0
    %109 = vmatprep.subr.mxu0 0.0
    %110 = vmatpush2.msra.mxu0 0.0
    %111 = vmatprep.subr.mxu0 0.0
    %112 = vmatpush2.msra.mxu0 0.0
    %113 = vmatprep.subr.mxu0 0.0
    %114 = vmatpush2.msra.mxu0 0.0
    %115 = vmatprep.subr.mxu0 0.0
    %116 = vmatpush2.msra.mxu0 0.0
    %117 = vmatprep.subr.mxu0 0.0
    %118 = vmatpush2.msra.mxu0 0.0
    %119 = vmatprep.subr.mxu0 0.0
    %120 = vmatpush2.msra.mxu0 0.0
    %121 = vmatprep.subr.mxu0 0.0
    %122 = vmatpush2.msra.mxu0 0.0
    %123 = vmatprep.subr.mxu0 0.0
    %124 = vmatpush2.msra.mxu0 0.0
    %125 = vmatprep.subr.mxu0 0.0
    %126 = vmatpush2.msra.mxu0 0.0
    %127 = vmatprep.subr.mxu0 0.0
    %128 = vmatpush2.msra.mxu0 0.0
    %129 = vmatprep.subr.mxu0 0.0
    %130 = vmatpush2.msra.mxu0 0.0
    %131 = vmatprep.subr.mxu0 0.0
    %132 = vmatpush2.msra.mxu0 0.0
    %133 = vmatprep.subr.mxu0 0.0
    %134 = vmatpush2.msra.mxu0 0.0
    %135 = vmatprep.subr.mxu0 0.0
    %136 = vmatpush2.msra.mxu0 0.0
    %137 = vmatprep.subr.mxu0 0.0
    %138 = vmatpush2.msra.mxu0 0.0
    %139 = vmatprep.mubr.f32.mxu0 0.0
    %140 = vmatmul.mubr.f32.gmra.mxu0 %v64
    %v141 = vpop.f32.mrf.mxu0
    %v142 = vadd.f32 %v45, %v141
    %v143 = vpop.f32.mrf.mxu0
    %144 = vmatprep.mubr.f32.mxu0 0.0
    %145 = vmatmul.mubr.f32.gmra.mxu0 %v67
    %v146 = vpop.f32.mrf.mxu0
    %v147 = vadd.f32 %v50, %v146
    %v148 = vpop.f32.mrf.mxu0
    %149 = vmatprep.mubr.f32.mxu0 0.0
    %150 = vmatmul.mubr.f32.gmra.mxu0 %v70
    %v151 = vpop.f32.mrf.mxu0
    %v152 = vadd.f32 %v55, %v151
    %v153 = vpop.f32.mrf.mxu0
    %154 = vmatprep.mubr.f32.mxu0 0.0
    %155 = vmatmul.mubr.f32.gmra.mxu0 %v73
    %v156 = vpop.f32.mrf.mxu0
    %v157 = vadd.f32 %v60, %v156
    %v158 = vpop.f32.mrf.mxu0
    %159 = vdwg.mxu0
    %v160 = vmax.f32 %v142, 0.0
    %v161 = vmax.f32 %v147, 0.0
    %v162 = vmax.f32 %v152, 0.0
    %v163 = vmax.f32 %v157, 0.0
    %v164 = vld [vmem:[%s3] sm:$0xff]
    %v165 = vld [vmem:[%s3 + $0x8] sm:$0xff]
    %v166 = vld [vmem:[%s4] sm:$0xff]
    %v167 = vld [vmem:[%s4 + $0x8] sm:$0xff]
    %169 = vset.pattern.permute.xlu0 0
    %170 = vperm.xlu0 %169, %v166
    %v171 = vpop.permute.xlu0 %170
    %174 = vset.pattern.permute.xlu0 0
    %175 = vperm.xlu0 %174, %v167
    %v176 = vpop.permute.xlu0 %175
    %vm178 = vcmask 261120
    %v180 = vsel %vm178, %v164, 0
    %v183 = vsel %vm178, %v165, 0
    %185 = vmatprep.subr.mxu0 0.0
    %186 = vmatpush1.msra.mxu0 0.0
    %187 = vmatprep.subr.mxu0 0.0
    %188 = vmatpush1.msra.mxu0 0.0
    %189 = vmatprep.subr.mxu0 0.0
    %190 = vmatpush1.msra.mxu0 0.0
    %191 = vmatprep.subr.mxu0 0.0
    %192 = vmatpush1.msra.mxu0 0.0
    %193 = vmatprep.subr.mxu0 0.0
    %194 = vmatpush1.msra.mxu0 0.0
    %195 = vmatprep.subr.mxu0 0.0
    %196 = vmatpush1.msra.mxu0 0.0
    %197 = vmatprep.subr.mxu0 0.0
    %198 = vmatpush1.msra.mxu0 0.0
    %199 = vmatprep.subr.mxu0 0.0
    %200 = vmatpush1.msra.mxu0 0.0
    %201 = vmatprep.subr.mxu0 0.0
    %202 = vmatpush1.msra.mxu0 0.0
    %203 = vmatprep.subr.mxu0 0.0
    %204 = vmatpush1.msra.mxu0 0.0
    %205 = vmatprep.subr.mxu0 0.0
    %206 = vmatpush1.msra.mxu0 0.0
    %207 = vmatprep.subr.mxu0 0.0
    %208 = vmatpush1.msra.mxu0 0.0
    %209 = vmatprep.subr.mxu0 0.0
    %210 = vmatpush1.msra.mxu0 %v163
    %211 = vmatprep.subr.mxu0 0.0
    %212 = vmatpush1.msra.mxu0 %v162
    %213 = vmatprep.subr.mxu0 0.0
    %214 = vmatpush1.msra.mxu0 %v161
    %215 = vmatprep.subr.mxu0 0.0
    %216 = vmatpush1.msra.mxu0 %v160
    %217 = vmatprep.subr.mxu0 0.0
    %218 = vmatpush2.msra.mxu0 0.0
    %219 = vmatprep.subr.mxu0 0.0
    %220 = vmatpush2.msra.mxu0 0.0
    %221 = vmatprep.subr.mxu0 0.0
    %222 = vmatpush2.msra.mxu0 0.0
    %223 = vmatprep.subr.mxu0 0.0
    %224 = vmatpush2.msra.mxu0 0.0
    %225 = vmatprep.subr.mxu0 0.0
    %226 = vmatpush2.msra.mxu0 0.0
    %227 = vmatprep.subr.mxu0 0.0
    %228 = vmatpush2.msra.mxu0 0.0
    %229 = vmatprep.subr.mxu0 0.0
    %230 = vmatpush2.msra.mxu0 0.0
    %231 = vmatprep.subr.mxu0 0.0
    %232 = vmatpush2.msra.mxu0 0.0
    %233 = vmatprep.subr.mxu0 0.0
    %234 = vmatpush2.msra.mxu0 0.0
    %235 = vmatprep.subr.mxu0 0.0
    %236 = vmatpush2.msra.mxu0 0.0
    %237 = vmatprep.subr.mxu0 0.0
    %238 = vmatpush2.msra.mxu0 0.0
    %239 = vmatprep.subr.mxu0 0.0
    %240 = vmatpush2.msra.mxu0 0.0
    %241 = vmatprep.subr.mxu0 0.0
    %242 = vmatpush2.msra.mxu0 0.0
    %243 = vmatprep.subr.mxu0 0.0
    %244 = vmatpush2.msra.mxu0 0.0
    %245 = vmatprep.subr.mxu0 0.0
    %246 = vmatpush2.msra.mxu0 0.0
    %247 = vmatprep.subr.mxu0 0.0
    %248 = vmatpush2.msra.mxu0 0.0
    %249 = vmatprep.mubr.f32.mxu0 0.0
    %250 = vmatmul.mubr.f32.gmra.mxu0 %v180
    %v251 = vpop.f32.mrf.mxu0
    %v252 = vadd.f32 %v171, %v251
    %v253 = vpop.f32.mrf.mxu0
    %254 = vmatprep.mubr.f32.mxu0 0.0
    %255 = vmatmul.mubr.f32.gmra.mxu0 %v183
    %v256 = vpop.f32.mrf.mxu0
    %v257 = vadd.f32 %v176, %v256
    %v258 = vpop.f32.mrf.mxu0
    %259 = vdwg.mxu0
    %v260 = vld [vmem:[%s5] sm:$0xff]
    %v261 = vld [vmem:[%s5 + $0x8] sm:$0xff]
    %v262 = vld [vmem:[%s5 + $0x10] sm:$0xff]
    %v263 = vld [vmem:[%s5 + $0x18] sm:$0xff]
    %vm264 = vcmask 130048
    %v266 = vsel %vm264, %v260, 0
    %v269 = vsel %vm264, %v261, 0
    %v272 = vsel %vm264, %v262, 0
    %v275 = vsel %vm264, %v263, 0
    %277 = vmatprep.subr.mxu0 0.0
    %278 = vmatpush1.msra.mxu0 0.0
    %279 = vmatprep.subr.mxu0 0.0
    %280 = vmatpush1.msra.mxu0 0.0
    %281 = vmatprep.subr.mxu0 0.0
    %282 = vmatpush1.msra.mxu0 0.0
    %283 = vmatprep.subr.mxu0 0.0
    %284 = vmatpush1.msra.mxu0 0.0
    %285 = vmatprep.subr.mxu0 0.0
    %286 = vmatpush1.msra.mxu0 0.0
    %287 = vmatprep.subr.mxu0 0.0
    %288 = vmatpush1.msra.mxu0 0.0
    %289 = vmatprep.subr.mxu0 0.0
    %290 = vmatpush1.msra.mxu0 0.0
    %291 = vmatprep.subr.mxu0 0.0
    %292 = vmatpush1.msra.mxu0 0.0
    %293 = vmatprep.subr.mxu0 0.0
    %294 = vmatpush1.msra.mxu0 0.0
    %295 = vmatprep.subr.mxu0 0.0
    %296 = vmatpush1.msra.mxu0 0.0
    %297 = vmatprep.subr.mxu0 0.0
    %298 = vmatpush1.msra.mxu0 0.0
    %299 = vmatprep.subr.mxu0 0.0
    %300 = vmatpush1.msra.mxu0 0.0
    %301 = vmatprep.subr.mxu0 0.0
    %302 = vmatpush1.msra.mxu0 0.0
    %303 = vmatprep.subr.mxu0 0.0
    %304 = vmatpush1.msra.mxu0 0.0
    %305 = vmatprep.subr.mxu0 0.0
    %306 = vmatpush1.msra.mxu0 %v257
    %307 = vmatprep.subr.mxu0 0.0
    %308 = vmatpush1.msra.mxu0 %v252
    %309 = vmatprep.subr.mxu0 0.0
    %310 = vmatpush2.msra.mxu0 0.0
    %311 = vmatprep.subr.mxu0 0.0
    %312 = vmatpush2.msra.mxu0 0.0
    %313 = vmatprep.subr.mxu0 0.0
    %314 = vmatpush2.msra.mxu0 0.0
    %315 = vmatprep.subr.mxu0 0.0
    %316 = vmatpush2.msra.mxu0 0.0
    %317 = vmatprep.subr.mxu0 0.0
    %318 = vmatpush2.msra.mxu0 0.0
    %319 = vmatprep.subr.mxu0 0.0
    %320 = vmatpush2.msra.mxu0 0.0
    %321 = vmatprep.subr.mxu0 0.0
    %322 = vmatpush2.msra.mxu0 0.0
    %323 = vmatprep.subr.mxu0 0.0
    %324 = vmatpush2.msra.mxu0 0.0
    %325 = vmatprep.subr.mxu0 0.0
    %326 = vmatpush2.msra.mxu0 0.0
    %327 = vmatprep.subr.mxu0 0.0
    %328 = vmatpush2.msra.mxu0 0.0
    %329 = vmatprep.subr.mxu0 0.0
    %330 = vmatpush2.msra.mxu0 0.0
    %331 = vmatprep.subr.mxu0 0.0
    %332 = vmatpush2.msra.mxu0 0.0
    %333 = vmatprep.subr.mxu0 0.0
    %334 = vmatpush2.msra.mxu0 0.0
    %335 = vmatprep.subr.mxu0 0.0
    %336 = vmatpush2.msra.mxu0 0.0
    %337 = vmatprep.subr.mxu0 0.0
    %338 = vmatpush2.msra.mxu0 0.0
    %339 = vmatprep.subr.mxu0 0.0
    %340 = vmatpush2.msra.mxu0 0.0
    %341 = vmatprep.mubr.f32.mxu0 0.0
    %342 = vmatmul.mubr.f32.gmra.mxu0 %v266
    %v343 = vpop.f32.mrf.mxu0
    %v344 = vadd.f32 0.0, %v343
    %v345 = vpop.f32.mrf.mxu0
    %346 = vmatprep.mubr.f32.mxu0 0.0
    %347 = vmatmul.mubr.f32.gmra.mxu0 %v269
    %v348 = vpop.f32.mrf.mxu0
    %v349 = vadd.f32 0.0, %v348
    %v350 = vpop.f32.mrf.mxu0
    %351 = vmatprep.mubr.f32.mxu0 0.0
    %352 = vmatmul.mubr.f32.gmra.mxu0 %v272
    %v353 = vpop.f32.mrf.mxu0
    %v354 = vadd.f32 0.0, %v353
    %v355 = vpop.f32.mrf.mxu0
    %356 = vmatprep.mubr.f32.mxu0 0.0
    %357 = vmatmul.mubr.f32.gmra.mxu0 %v275
    %v358 = vpop.f32.mrf.mxu0
    %v359 = vadd.f32 0.0, %v358
    %v360 = vpop.f32.mrf.mxu0
    %361 = vdwg.mxu0
    %v362 = vmul.f32 %v252, %v252
    %v363 = vmul.f32 %v257, %v257
    %v364 = vadd.f32 %v362, %v363
    %v365 = vrot.slane %v364, 4
    %v366 = vadd.f32 %v364, %v365
    %v367 = vrot.slane %v366, 2
    %v368 = vadd.f32 %v366, %v367
    %v369 = vrot.slane %v368, 1
    %v370 = vadd.f32 %v368, %v369
    %v371 = vld [vmem:[%s6] sm:$0xff]
    %v372 = vld [vmem:[%s6 + $0x8] sm:$0xff]
    %v373 = vld [vmem:[%s6 + $0x10] sm:$0xff]
    %v374 = vld [vmem:[%s6 + $0x18] sm:$0xff]
    %376 = vset.pattern.permute.xlu0 0
    %377 = vperm.xlu0 %376, %v371
    %v378 = vpop.permute.xlu0 %377
    %381 = vset.pattern.permute.xlu0 0
    %382 = vperm.xlu0 %381, %v372
    %v383 = vpop.permute.xlu0 %382
    %386 = vset.pattern.permute.xlu0 0
    %387 = vperm.xlu0 %386, %v373
    %v388 = vpop.permute.xlu0 %387
    %391 = vset.pattern.permute.xlu0 0
    %392 = vperm.xlu0 %391, %v374
    %v393 = vpop.permute.xlu0 %392
    %v395 = vadd.f32 %v378, %v370
    %v396 = vadd.f32 %v383, %v370
    %v397 = vadd.f32 %v388, %v370
    %v398 = vadd.f32 %v393, %v370
    %v399 = vmul.f32 %v344, 2.0
    %v400 = vmul.f32 %v349, 2.0
    %v401 = vmul.f32 %v354, 2.0
    %v402 = vmul.f32 %v359, 2.0
    %v403 = vsub.f32 %v395, %v399
    %v404 = vsub.f32 %v396, %v400
    %v405 = vsub.f32 %v397, %v401
    %v406 = vsub.f32 %v398, %v402
    %v407 = vmax.f32 %v403, 0.0
    %v408 = vmax.f32 %v404, 0.0
    %v409 = vmax.f32 %v405, 0.0
    %v410 = vmax.f32 %v406, 0.0
    %v411 = vmul.f32 %v407, -0.5
    %v412 = vmul.f32 %v408, -0.5
    %v413 = vmul.f32 %v409, -0.5
    %v414 = vmul.f32 %v410, -0.5
    %v415 = vmul.f32 %v411, 1.442695
    %v416 = vpow.pop %v415
    %v417 = vmul.f32 %v412, 1.442695
    %v418 = vpow.pop %v417
    %v419 = vmul.f32 %v413, 1.442695
    %v420 = vpow.pop %v419
    %v421 = vmul.f32 %v414, 1.442695
    %v422 = vpow.pop %v421
    %v423 = vld [vmem:[%s7] sm:$0xff]
    %v424 = vld [vmem:[%s7 + $0x8] sm:$0xff]
    %v425 = vld [vmem:[%s7 + $0x10] sm:$0xff]
    %v426 = vld [vmem:[%s7 + $0x18] sm:$0xff]
    %v428 = vsel %vm178, %v423, 0
    %v431 = vsel %vm178, %v424, 0
    %v434 = vsel %vm178, %v425, 0
    %v437 = vsel %vm178, %v426, 0
    %439 = vmatprep.subr.mxu0 0.0
    %440 = vmatpush1.msra.mxu0 0.0
    %441 = vmatprep.subr.mxu0 0.0
    %442 = vmatpush1.msra.mxu0 0.0
    %443 = vmatprep.subr.mxu0 0.0
    %444 = vmatpush1.msra.mxu0 0.0
    %445 = vmatprep.subr.mxu0 0.0
    %446 = vmatpush1.msra.mxu0 0.0
    %447 = vmatprep.subr.mxu0 0.0
    %448 = vmatpush1.msra.mxu0 0.0
    %449 = vmatprep.subr.mxu0 0.0
    %450 = vmatpush1.msra.mxu0 0.0
    %451 = vmatprep.subr.mxu0 0.0
    %452 = vmatpush1.msra.mxu0 0.0
    %453 = vmatprep.subr.mxu0 0.0
    %454 = vmatpush1.msra.mxu0 0.0
    %455 = vmatprep.subr.mxu0 0.0
    %456 = vmatpush1.msra.mxu0 0.0
    %457 = vmatprep.subr.mxu0 0.0
    %458 = vmatpush1.msra.mxu0 0.0
    %459 = vmatprep.subr.mxu0 0.0
    %460 = vmatpush1.msra.mxu0 0.0
    %461 = vmatprep.subr.mxu0 0.0
    %462 = vmatpush1.msra.mxu0 0.0
    %463 = vmatprep.subr.mxu0 0.0
    %464 = vmatpush1.msra.mxu0 %v422
    %465 = vmatprep.subr.mxu0 0.0
    %466 = vmatpush1.msra.mxu0 %v420
    %467 = vmatprep.subr.mxu0 0.0
    %468 = vmatpush1.msra.mxu0 %v418
    %469 = vmatprep.subr.mxu0 0.0
    %470 = vmatpush1.msra.mxu0 %v416
    %471 = vmatprep.subr.mxu0 0.0
    %472 = vmatpush2.msra.mxu0 0.0
    %473 = vmatprep.subr.mxu0 0.0
    %474 = vmatpush2.msra.mxu0 0.0
    %475 = vmatprep.subr.mxu0 0.0
    %476 = vmatpush2.msra.mxu0 0.0
    %477 = vmatprep.subr.mxu0 0.0
    %478 = vmatpush2.msra.mxu0 0.0
    %479 = vmatprep.subr.mxu0 0.0
    %480 = vmatpush2.msra.mxu0 0.0
    %481 = vmatprep.subr.mxu0 0.0
    %482 = vmatpush2.msra.mxu0 0.0
    %483 = vmatprep.subr.mxu0 0.0
    %484 = vmatpush2.msra.mxu0 0.0
    %485 = vmatprep.subr.mxu0 0.0
    %486 = vmatpush2.msra.mxu0 0.0
    %487 = vmatprep.subr.mxu0 0.0
    %488 = vmatpush2.msra.mxu0 0.0
    %489 = vmatprep.subr.mxu0 0.0
    %490 = vmatpush2.msra.mxu0 0.0
    %491 = vmatprep.subr.mxu0 0.0
    %492 = vmatpush2.msra.mxu0 0.0
    %493 = vmatprep.subr.mxu0 0.0
    %494 = vmatpush2.msra.mxu0 0.0
    %495 = vmatprep.subr.mxu0 0.0
    %496 = vmatpush2.msra.mxu0 0.0
    %497 = vmatprep.subr.mxu0 0.0
    %498 = vmatpush2.msra.mxu0 0.0
    %499 = vmatprep.subr.mxu0 0.0
    %500 = vmatpush2.msra.mxu0 0.0
    %501 = vmatprep.subr.mxu0 0.0
    %502 = vmatpush2.msra.mxu0 0.0
    %503 = vmatprep.mubr.f32.mxu0 0.0
    %504 = vmatmul.mubr.f32.gmra.mxu0 %v428
    %v505 = vpop.f32.mrf.mxu0
    %v506 = vadd.f32 0.0, %v505
    %v507 = vpop.f32.mrf.mxu0
    %508 = vmatprep.mubr.f32.mxu0 0.0
    %509 = vmatmul.mubr.f32.gmra.mxu0 %v431
    %v510 = vpop.f32.mrf.mxu0
    %v511 = vadd.f32 0.0, %v510
    %v512 = vpop.f32.mrf.mxu0
    %513 = vmatprep.mubr.f32.mxu0 0.0
    %514 = vmatmul.mubr.f32.gmra.mxu0 %v434
    %v515 = vpop.f32.mrf.mxu0
    %v516 = vadd.f32 0.0, %v515
    %v517 = vpop.f32.mrf.mxu0
    %518 = vmatprep.mubr.f32.mxu0 0.0
    %519 = vmatmul.mubr.f32.gmra.mxu0 %v437
    %v520 = vpop.f32.mrf.mxu0
    %v521 = vadd.f32 0.0, %v520
    %v522 = vpop.f32.mrf.mxu0
    %523 = vdwg.mxu0
    %v524 = vld [vmem:[%s8] sm:$0x1]
    %v526 = vsel %vm178, %v524, 0
    %528 = vmatprep.subr.mxu0 0.0
    %529 = vmatpush1.msra.mxu0 0.0
    %530 = vmatprep.subr.mxu0 0.0
    %531 = vmatpush1.msra.mxu0 0.0
    %532 = vmatprep.subr.mxu0 0.0
    %533 = vmatpush1.msra.mxu0 0.0
    %534 = vmatprep.subr.mxu0 0.0
    %535 = vmatpush1.msra.mxu0 0.0
    %536 = vmatprep.subr.mxu0 0.0
    %537 = vmatpush1.msra.mxu0 0.0
    %538 = vmatprep.subr.mxu0 0.0
    %539 = vmatpush1.msra.mxu0 0.0
    %540 = vmatprep.subr.mxu0 0.0
    %541 = vmatpush1.msra.mxu0 0.0
    %542 = vmatprep.subr.mxu0 0.0
    %543 = vmatpush1.msra.mxu0 0.0
    %544 = vmatprep.subr.mxu0 0.0
    %545 = vmatpush1.msra.mxu0 0.0
    %546 = vmatprep.subr.mxu0 0.0
    %547 = vmatpush1.msra.mxu0 0.0
    %548 = vmatprep.subr.mxu0 0.0
    %549 = vmatpush1.msra.mxu0 0.0
    %550 = vmatprep.subr.mxu0 0.0
    %551 = vmatpush1.msra.mxu0 0.0
    %552 = vmatprep.subr.mxu0 0.0
    %553 = vmatpush1.msra.mxu0 %v422
    %554 = vmatprep.subr.mxu0 0.0
    %555 = vmatpush1.msra.mxu0 %v420
    %556 = vmatprep.subr.mxu0 0.0
    %557 = vmatpush1.msra.mxu0 %v418
    %558 = vmatprep.subr.mxu0 0.0
    %559 = vmatpush1.msra.mxu0 %v416
    %560 = vmatprep.subr.mxu0 0.0
    %561 = vmatpush2.msra.mxu0 0.0
    %562 = vmatprep.subr.mxu0 0.0
    %563 = vmatpush2.msra.mxu0 0.0
    %564 = vmatprep.subr.mxu0 0.0
    %565 = vmatpush2.msra.mxu0 0.0
    %566 = vmatprep.subr.mxu0 0.0
    %567 = vmatpush2.msra.mxu0 0.0
    %568 = vmatprep.subr.mxu0 0.0
    %569 = vmatpush2.msra.mxu0 0.0
    %570 = vmatprep.subr.mxu0 0.0
    %571 = vmatpush2.msra.mxu0 0.0
    %572 = vmatprep.subr.mxu0 0.0
    %573 = vmatpush2.msra.mxu0 0.0
    %574 = vmatprep.subr.mxu0 0.0
    %575 = vmatpush2.msra.mxu0 0.0
    %576 = vmatprep.subr.mxu0 0.0
    %577 = vmatpush2.msra.mxu0 0.0
    %578 = vmatprep.subr.mxu0 0.0
    %579 = vmatpush2.msra.mxu0 0.0
    %580 = vmatprep.subr.mxu0 0.0
    %581 = vmatpush2.msra.mxu0 0.0
    %582 = vmatprep.subr.mxu0 0.0
    %583 = vmatpush2.msra.mxu0 0.0
    %584 = vmatprep.subr.mxu0 0.0
    %585 = vmatpush2.msra.mxu0 0.0
    %586 = vmatprep.subr.mxu0 0.0
    %587 = vmatpush2.msra.mxu0 0.0
    %588 = vmatprep.subr.mxu0 0.0
    %589 = vmatpush2.msra.mxu0 0.0
    %590 = vmatprep.subr.mxu0 0.0
    %591 = vmatpush2.msra.mxu0 0.0
    %592 = vmatprep.mubr.f32.mxu0 0.0
    %593 = vmatmul.mubr.f32.gmra.mxu0 %v526
    %v594 = vpop.f32.mrf.mxu0
    %v595 = vadd.f32 0.0, %v594
    %v596 = vpop.f32.mrf.mxu0
    %597 = vdwg.mxu0
    %v598 = vmul.f32 %v506, %v416
    %v599 = vmul.f32 %v511, %v418
    %v600 = vmul.f32 %v516, %v420
    %v601 = vmul.f32 %v521, %v422
    %v602 = vadd.f32 %v598, %v599
    %v603 = vadd.f32 %v602, %v600
    %v604 = vadd.f32 %v603, %v601
    %v605 = vrot.slane %v604, 4
    %v606 = vadd.f32 %v604, %v605
    %v607 = vrot.slane %v606, 2
    %v608 = vadd.f32 %v606, %v607
    %v609 = vrot.slane %v608, 1
    %v610 = vadd.f32 %v608, %v609
    %v611 = vadd.f32 %v610, 1.0
    %v612 = vmax.f32 %v611, 1e-06
    %613 = vst [vmem:[#allocation2] sm:$0x1] %v595
    %614 = vst [vmem:[#allocation2 + $0x1] sm:$0x1] %v612
    // Predicated region
    $region38: #{tpu_custom_call.1} parent=1 // pred_check
      _
    $region39: #{tpu_custom_call.1} parent=1 // pred_check_branch
      %616 = sbr.rel (0) target = $region41
    $region40: #{tpu_custom_call.1} parent=1 // pred_region
      %s618 = ssub.s32 32, 32
      %619 = vsyncadd [#allocation3], %s618
      %s621 = sshll.u32 [#allocation2], 4
      %s622 = int_to_ptr.vmem [resolvable:$true] %s621
      %624 = dma.vmem_to_hbm [thread:$0]  %s622, 32, %s9, [#allocation3]
    $region41: #{tpu_custom_call.1} parent=1 // pred_fallthru
      _
    // Predicated region
    $region42: #{tpu_custom_call.1} parent=1 // pred_check
      _
    $region43: #{tpu_custom_call.1} parent=1 // pred_check_branch
      %626 = sbr.rel (0) target = $region45
    $region44: #{tpu_custom_call.1} parent=1 // pred_region
      %627 = dma.done [#allocation3], 32
    $region45: #{tpu_custom_call.1} parent=1 // pred_fallthru
      _
    %628 = vsyncpa [#allocation3], 1

</llo_original>
